<compile_context>
chip_gen: v5e
topology: v5e:2x2
jax: 0.10.0
libtpu: 0.0.40
codegen_flags: <defaults>
</compile_context>

<pallas_src>
import jax
import jax.numpy as jnp
from jax.experimental import pallas as pl
from jax.experimental.pallas import tpu as pltpu

LANE = 128


def _round_up(x, m):
    return (x + m - 1) // m * m


def _lane_pad(n):
    return _round_up(n, LANE)


def _mlp_kernel(x_ref, w1_ref, w2_ref, ws_ref, wi_ref, b_ref, sem_ref, inst_ref):
    # Static (trace-time) sizes and lane-aligned packed-bias offsets.
    d1 = w1_ref.shape[1]                       # 64
    d2 = w2_ref.shape[1]                       # 128
    n_sem = ws_ref.shape[1]                    # 19
    n_inst = wi_ref.shape[1]                   # 32
    o1 = 0
    o2 = o1 + _lane_pad(d1)
    o3 = o2 + _lane_pad(d2)
    o4 = o3 + _lane_pad(n_sem)

    x = x_ref[...]                             # (row_tile, 4) f32

    # K=4 underutilizes the MXU, but the kernel is memory-bound so this is
    # not on the critical path.
    h1 = jnp.dot(x, w1_ref[...], preferred_element_type=jnp.float32)
    h1 = jnp.maximum(h1 + b_ref[:, o1:o1 + d1], 0.0)

    h2 = jnp.dot(h1, w2_ref[...], preferred_element_type=jnp.float32)
    h2 = jnp.maximum(h2 + b_ref[:, o2:o2 + d2], 0.0)

    sem = jnp.dot(h2, ws_ref[...], preferred_element_type=jnp.float32)
    sem = sem + b_ref[:, o3:o3 + n_sem]
    inst = jnp.dot(h2, wi_ref[...], preferred_element_type=jnp.float32)
    inst = inst + b_ref[:, o4:o4 + n_inst]

    sem_ref[...] = sem.astype(sem_ref.dtype)
    inst_ref[...] = inst.astype(inst_ref.dtype)


def _pack_biases(b1, b2, bs, bi):
    """Pack all biases into one lane-aligned (1, 512) buffer."""
    segs = []
    for b in (b1, b2, bs, bi):
        width = _lane_pad(b.shape[1])
        segs.append(jnp.pad(b, ((0, 0), (0, width - b.shape[1]))))
    return jnp.concatenate(segs, axis=1)


def _chip_budget():
    """(target rows per tile, VMEM-limit cap) sized per TPU generation."""
    vmem_phys = 128 << 20
    try:
        info = pltpu.get_tpu_info()
        v = getattr(info, "vmem_capacity_bytes", None)
        if v:
            vmem_phys = int(v)
    except Exception:
        pass
    if vmem_phys <= (64 << 20):
        # v7x-class: half the VMEM, 2 TensorCores/chip.
        return 8192, 40 << 20
    # v5e / v6e class: 128 MiB physical VMEM.
    return 16384, 96 << 20


def simple_model_forward(points, params, *, row_tile=None):
    """points: (N, 4) float32. Returns (semantic (N,19), instance (N,32))."""
    w1, b1, w2, b2, ws, bs, wi, bi = params
    N, Cin = points.shape
    d1, d2 = w1.shape[1], w2.shape[1]
    n_sem, n_inst = ws.shape[1], wi.shape[1]

    b_packed = _pack_biases(b1, b2, bs, bi)          # (1, 512)

    # ---- Per-row VMEM cost with lane padding (last dim of every VMEM buffer
    #      is padded to 128 lanes); x and the two outputs are double-buffered.
    bytes_per_row = 4 * (2 * _lane_pad(Cin) + _lane_pad(d1) + _lane_pad(d2)
                         + 2 * _lane_pad(n_sem) + 2 * _lane_pad(n_inst))

    target_rows, vmem_cap = _chip_budget()
    max_rows_fit = max(1024, ((vmem_cap - (2 << 20)) // bytes_per_row) // 8 * 8)
    target_rows = min(target_rows, max_rows_fit)

    # ---- Row tiling: large generation-sized tiles; >=2 (even) steps when N
    #      is non-trivial so both v7x TensorCores get work.
    if row_tile is None:
        if N <= 1024:
            row_tile = _round_up(max(N, 8), 8)
        else:
            steps = max(2, pl.cdiv(N, target_rows))
            if steps % 2:
                steps += 1
            row_tile = min(_round_up(pl.cdiv(N, steps), 8), target_rows)
    else:
        row_tile = _round_up(row_tile, 8)

    N_pad = _round_up(N, row_tile)
    grid_rows = N_pad // row_tile
    if N_pad != N:
        # Padded rows produce finite bias-propagated values; sliced off below.
        points = jnp.pad(points, ((0, N_pad - N), (0, 0)))

    param_bytes = 4 * (w1.size + w2.size + ws.size + wi.size + b_packed.size)
    vmem_est = row_tile * bytes_per_row + param_bytes + (2 << 20)
    vmem_limit = int(min(max(vmem_est, 16 << 20), max(vmem_cap, 16 << 20)))

    cost = pl.CostEstimate(
        flops=2 * N_pad * (Cin * d1 + d1 * d2 + d2 * (n_sem + n_inst)),
        transcendentals=0,
        bytes_accessed=4 * (N_pad * (Cin + n_sem + n_inst)) + param_bytes,
    )

    sem_out, inst_out = pl.pallas_call(
        _mlp_kernel,
        out_shape=(
            jax.ShapeDtypeStruct((N_pad, n_sem), points.dtype),
            jax.ShapeDtypeStruct((N_pad, n_inst), points.dtype),
        ),
        grid_spec=pltpu.PrefetchScalarGridSpec(
            num_scalar_prefetch=0,
            grid=(grid_rows,),
            in_specs=[
                pl.BlockSpec((row_tile, Cin), lambda i: (i, 0)),   # point rows
                pl.BlockSpec(w1.shape, lambda i: (0, 0)),          # W1 (resident)
                pl.BlockSpec(w2.shape, lambda i: (0, 0)),          # W2 (resident)
                pl.BlockSpec(ws.shape, lambda i: (0, 0)),          # Ws (resident)
                pl.BlockSpec(wi.shape, lambda i: (0, 0)),          # Wi (resident)
                pl.BlockSpec(b_packed.shape, lambda i: (0, 0)),    # packed biases
            ],
            out_specs=[
                pl.BlockSpec((row_tile, n_sem), lambda i: (i, 0)),
                pl.BlockSpec((row_tile, n_inst), lambda i: (i, 0)),
            ],
        ),
        compiler_params=pltpu.CompilerParams(
            dimension_semantics=("parallel",),
            vmem_limit_bytes=vmem_limit,
        ),
        cost_estimate=cost,
    )(points, w1, w2, ws, wi, b_packed)

    if N_pad != N:
        sem_out = sem_out[:N]
        inst_out = inst_out[:N]
    return sem_out, inst_out


def init_params(key, instance_embedding_dim=32, dtype=jnp.float32):
    """Deterministic synthetic init (PyTorch-like uniform fan-in scaling)."""
    def linear(key, fan_in, fan_out):
        kw, kb = jax.random.split(key)
        bound = 1.0 / jnp.sqrt(fan_in)
        w = jax.random.uniform(kw, (fan_in, fan_out), dtype, -bound, bound)
        # biases kept 2D (1, out) for TPU-friendly broadcasting in-kernel
        b = jax.random.uniform(kb, (1, fan_out), dtype, -bound, bound)
        return w, b

    k1, k2, k3, k4 = jax.random.split(key, 4)
    w1, b1 = linear(k1, 4, 64)
    w2, b2 = linear(k2, 64, 128)
    ws, bs = linear(k3, 128, 19)
    wi, bi = linear(k4, 128, instance_embedding_dim)
    return (w1, b1, w2, b2, ws, bs, wi, bi)


def _reference(points, params):
    (w1, b1, w2, b2, ws, bs, wi, bi) = params
    h1 = jnp.maximum(points @ w1 + b1, 0.0)
    h2 = jnp.maximum(h1 @ w2 + b2, 0.0)
    return h2 @ ws + bs, h2 @ wi + bi


if __name__ == "__main__":
    key = jax.random.PRNGKey(0)
    kp, kx = jax.random.split(key)

    params = init_params(kp, instance_embedding_dim=32)

    # Small deterministic example: 256 points, 4 features each.
    points = jax.random.normal(kx, (256, 4), jnp.float32)
    sem, inst = simple_model_forward(points, params)
    sem = jax.block_until_ready(sem)
    inst = jax.block_until_ready(inst)

    sem_ref, inst_ref = _reference(points, params)
    assert sem.shape == (256, 19) and inst.shape == (256, 32)
    assert jnp.allclose(sem, sem_ref, atol=1e-5, rtol=1e-5)
    assert jnp.allclose(inst, inst_ref, atol=1e-5, rtol=1e-5)

    # Exercise the multi-step grid + row-padding path as well.
    points2 = jax.random.normal(jax.random.PRNGKey(7), (1000, 4), jnp.float32)
    sem2, inst2 = simple_model_forward(points2, params, row_tile=256)
    sem2 = jax.block_until_ready(sem2)
    inst2 = jax.block_until_ready(inst2)
    sem2_ref, inst2_ref = _reference(points2, params)
    assert sem2.shape == (1000, 19) and inst2.shape == (1000, 32)
    assert jnp.allclose(sem2, sem2_ref, atol=1e-5, rtol=1e-5)
    assert jnp.allclose(inst2, inst2_ref, atol=1e-5, rtol=1e-5)

    # Exercise the auto-tiled large-N path (>=2 even grid steps).
    points3 = jax.random.normal(jax.random.PRNGKey(11), (3072, 4), jnp.float32)
    sem3, inst3 = simple_model_forward(points3, params)
    sem3 = jax.block_until_ready(sem3)
    inst3 = jax.block_until_ready(inst3)
    sem3_ref, inst3_ref = _reference(points3, params)
    assert jnp.allclose(sem3, sem3_ref, atol=1e-5, rtol=1e-5)
    assert jnp.allclose(inst3, inst3_ref, atol=1e-5, rtol=1e-5)

    print("KERNEL_OK")
</pallas_src>

<mosaic_0001>
module attributes {stable_mosaic.version = 11 : i64} {
  func.func @_mlp_kernel(%arg0: i32, %arg1: memref<256x4xf32, #tpu.memory_space<vmem>>, %arg2: memref<4x64xf32, #tpu.memory_space<vmem>>, %arg3: memref<64x128xf32, #tpu.memory_space<vmem>>, %arg4: memref<128x19xf32, #tpu.memory_space<vmem>>, %arg5: memref<128x32xf32, #tpu.memory_space<vmem>>, %arg6: memref<1x512xf32, #tpu.memory_space<vmem>>, %arg7: memref<256x19xf32, #tpu.memory_space<vmem>>, %arg8: memref<256x32xf32, #tpu.memory_space<vmem>>) attributes {dimension_semantics = [#tpu.dimension_semantics<parallel>], iteration_bounds = array<i64: 1>, scalar_prefetch = 0 : i64, scratch_operands = 0 : i64, tpu.core_type = #tpu.core_type<tc>, window_params = [{transform_indices = @transform_0, window_bounds = array<i64: 256, 4>}, {pipeline_mode = #tpu.pipeline_mode<synchronous>, transform_indices = @transform_1, window_bounds = array<i64: 4, 64>}, {pipeline_mode = #tpu.pipeline_mode<synchronous>, transform_indices = @transform_2, window_bounds = array<i64: 64, 128>}, {pipeline_mode = #tpu.pipeline_mode<synchronous>, transform_indices = @transform_3, window_bounds = array<i64: 128, 19>}, {pipeline_mode = #tpu.pipeline_mode<synchronous>, transform_indices = @transform_4, window_bounds = array<i64: 128, 32>}, {pipeline_mode = #tpu.pipeline_mode<synchronous>, transform_indices = @transform_5, window_bounds = array<i64: 1, 512>}, {transform_indices = @transform_6, window_bounds = array<i64: 256, 19>}, {transform_indices = @transform_7, window_bounds = array<i64: 256, 32>}]} {
    %c0 = arith.constant 0 : index
    %c0_0 = arith.constant 0 : index
    %0 = vector.load %arg1[%c0, %c0_0] : memref<256x4xf32, #tpu.memory_space<vmem>>, vector<256x4xf32>
    %c0_1 = arith.constant 0 : index
    %c0_2 = arith.constant 0 : index
    %1 = vector.load %arg2[%c0_1, %c0_2] : memref<4x64xf32, #tpu.memory_space<vmem>>, vector<4x64xf32>
    %cst = arith.constant dense<0.000000e+00> : vector<256x64xf32>
    %2 = tpu.matmul %0, %1, %cst {dimension_numbers = #tpu.dot_dimension_numbers<[1], [0], [0], [1], [0, 0, 1, 1], [], []>} : vector<256x4xf32>, vector<4x64xf32>, vector<256x64xf32> -> vector<256x64xf32>
    %c0_3 = arith.constant 0 : index
    %c0_4 = arith.constant 0 : index
    %3 = vector.load %arg6[%c0_3, %c0_4] : memref<1x512xf32, #tpu.memory_space<vmem>>, vector<1x64xf32>
    %4 = vector.broadcast %3 : vector<1x64xf32> to vector<256x64xf32>
    %5 = arith.addf %2, %4 : vector<256x64xf32>
    %cst_5 = arith.constant 0.000000e+00 : f32
    %6 = vector.broadcast %cst_5 : f32 to vector<256x64xf32>
    %7 = arith.maximumf %5, %6 : vector<256x64xf32>
    %c0_6 = arith.constant 0 : index
    %c0_7 = arith.constant 0 : index
    %8 = vector.load %arg3[%c0_6, %c0_7] : memref<64x128xf32, #tpu.memory_space<vmem>>, vector<64x128xf32>
    %cst_8 = arith.constant dense<0.000000e+00> : vector<256x128xf32>
    %9 = tpu.matmul %7, %8, %cst_8 {dimension_numbers = #tpu.dot_dimension_numbers<[1], [0], [0], [1], [0, 0, 1, 1], [], []>} : vector<256x64xf32>, vector<64x128xf32>, vector<256x128xf32> -> vector<256x128xf32>
    %c0_9 = arith.constant 0 : index
    %c128 = arith.constant 128 : index
    %10 = vector.load %arg6[%c0_9, %c128] : memref<1x512xf32, #tpu.memory_space<vmem>>, vector<1x128xf32>
    %11 = vector.broadcast %10 : vector<1x128xf32> to vector<256x128xf32>
    %12 = arith.addf %9, %11 : vector<256x128xf32>
    %cst_10 = arith.constant 0.000000e+00 : f32
    %13 = vector.broadcast %cst_10 : f32 to vector<256x128xf32>
    %14 = arith.maximumf %12, %13 : vector<256x128xf32>
    %c0_11 = arith.constant 0 : index
    %c0_12 = arith.constant 0 : index
    %15 = vector.load %arg4[%c0_11, %c0_12] : memref<128x19xf32, #tpu.memory_space<vmem>>, vector<128x19xf32>
    %cst_13 = arith.constant dense<0.000000e+00> : vector<256x19xf32>
    %16 = tpu.matmul %14, %15, %cst_13 {dimension_numbers = #tpu.dot_dimension_numbers<[1], [0], [0], [1], [0, 0, 1, 1], [], []>} : vector<256x128xf32>, vector<128x19xf32>, vector<256x19xf32> -> vector<256x19xf32>
    %c0_14 = arith.constant 0 : index
    %c256 = arith.constant 256 : index
    %17 = vector.load %arg6[%c0_14, %c256] : memref<1x512xf32, #tpu.memory_space<vmem>>, vector<1x19xf32>
    %18 = vector.broadcast %17 : vector<1x19xf32> to vector<256x19xf32>
    %19 = arith.addf %16, %18 : vector<256x19xf32>
    %c0_15 = arith.constant 0 : index
    %c0_16 = arith.constant 0 : index
    %20 = vector.load %arg5[%c0_15, %c0_16] : memref<128x32xf32, #tpu.memory_space<vmem>>, vector<128x32xf32>
    %cst_17 = arith.constant dense<0.000000e+00> : vector<256x32xf32>
    %21 = tpu.matmul %14, %20, %cst_17 {dimension_numbers = #tpu.dot_dimension_numbers<[1], [0], [0], [1], [0, 0, 1, 1], [], []>} : vector<256x128xf32>, vector<128x32xf32>, vector<256x32xf32> -> vector<256x32xf32>
    %c0_18 = arith.constant 0 : index
    %c384 = arith.constant 384 : index
    %22 = vector.load %arg6[%c0_18, %c384] : memref<1x512xf32, #tpu.memory_space<vmem>>, vector<1x32xf32>
    %23 = vector.broadcast %22 : vector<1x32xf32> to vector<256x32xf32>
    %24 = arith.addf %21, %23 : vector<256x32xf32>
    %c0_19 = arith.constant 0 : index
    %c0_20 = arith.constant 0 : index
    %25 = vector.load %arg7[%c0_19, %c0_20] : memref<256x19xf32, #tpu.memory_space<vmem>>, vector<256x19xf32>
    tpu.vector_store %arg7[%c0_19, %c0_20], %19 {strides = array<i32>} : memref<256x19xf32, #tpu.memory_space<vmem>>, vector<256x19xf32>,
    %c0_21 = arith.constant 0 : index
    %c0_22 = arith.constant 0 : index
    %26 = vector.load %arg8[%c0_21, %c0_22] : memref<256x32xf32, #tpu.memory_space<vmem>>, vector<256x32xf32>
    tpu.vector_store %arg8[%c0_21, %c0_22], %24 {strides = array<i32>} : memref<256x32xf32, #tpu.memory_space<vmem>>, vector<256x32xf32>,
    return
  }
  func.func @transform_0(%arg0: i32) -> (i32, i32) {
    %c0_i32 = arith.constant 0 : i32
    %c0_i32_0 = arith.constant 0 : i32
    return %arg0, %c0_i32 : i32, i32
  }
  func.func @transform_1(%arg0: i32) -> (i32, i32) {
    %c0_i32 = arith.constant 0 : i32
    %c0_i32_0 = arith.constant 0 : i32
    %c0_i32_1 = arith.constant 0 : i32
    return %c0_i32, %c0_i32_0 : i32, i32
  }
  func.func @transform_2(%arg0: i32) -> (i32, i32) {
    %c0_i32 = arith.constant 0 : i32
    %c0_i32_0 = arith.constant 0 : i32
    %c0_i32_1 = arith.constant 0 : i32
    return %c0_i32, %c0_i32_0 : i32, i32
  }
  func.func @transform_3(%arg0: i32) -> (i32, i32) {
    %c0_i32 = arith.constant 0 : i32
    %c0_i32_0 = arith.constant 0 : i32
    %c0_i32_1 = arith.constant 0 : i32
    return %c0_i32, %c0_i32_0 : i32, i32
  }
  func.func @transform_4(%arg0: i32) -> (i32, i32) {
    %c0_i32 = arith.constant 0 : i32
    %c0_i32_0 = arith.constant 0 : i32
    %c0_i32_1 = arith.constant 0 : i32
    return %c0_i32, %c0_i32_0 : i32, i32
  }
  func.func @transform_5(%arg0: i32) -> (i32, i32) {
    %c0_i32 = arith.constant 0 : i32
    %c0_i32_0 = arith.constant 0 : i32
    %c0_i32_1 = arith.constant 0 : i32
    return %c0_i32, %c0_i32_0 : i32, i32
  }
  func.func @transform_6(%arg0: i32) -> (i32, i32) {
    %c0_i32 = arith.constant 0 : i32
    %c0_i32_0 = arith.constant 0 : i32
    return %arg0, %c0_i32 : i32, i32
  }
  func.func @transform_7(%arg0: i32) -> (i32, i32) {
    %c0_i32 = arith.constant 0 : i32
    %c0_i32_0 = arith.constant 0 : i32
    return %arg0, %c0_i32 : i32, i32
  }
}

</mosaic_0001>

<llo_original>
// kernel: tpu_custom_call.1
$region0: #{tpu_custom_call.1}
  #allocation0 [shape = 'u32[]', space=smem, size = 0x4, offset = 0x4, fixed_abs, tag = 'smem constant byte address 0x4 - core index']
  #allocation1 [shape = 'u32[72,128]{1,0:T(1,128)}', space=vmem, size = 0x9000, scoped, tag = 'internal scratch']
  %s0 = inlined_call_operand.vmem [shape: f32[256,4], index: 0, kind: input, shape index: {}]
  %s1 = inlined_call_operand.vmem [shape: f32[4,64], index: 1, kind: input, shape index: {}]
  %s2 = inlined_call_operand.vmem [shape: f32[64,128], index: 2, kind: input, shape index: {}]
  %s3 = inlined_call_operand.vmem [shape: f32[128,19], index: 3, kind: input, shape index: {}]
  %s4 = inlined_call_operand.vmem [shape: f32[128,32], index: 4, kind: input, shape index: {}]
  %s5 = inlined_call_operand.vmem [shape: f32[1,512], index: 5, kind: input, shape index: {}]
  %s6 = inlined_call_operand.vmem [shape: f32[256,19], index: 6, kind: output, shape index: {0}]
  %s7 = inlined_call_operand.vmem [shape: f32[256,32], index: 7, kind: output, shape index: {1}]
  %8 = xla_tuple %s6, %s7
  %s9 = sld [smem:[#allocation0]]
  $region42: #{tpu_custom_call.1} parent=0
    _
  %s11 = ssub.s32 1, %s9
  %s12 = scalar_select 0, %s11, %s9
  // Predicated region
  $region2: #{tpu_custom_call.1} parent=0 // pred_check
    _
  $region3: #{tpu_custom_call.1} parent=0 // pred_check_branch
    %14 = sbr.rel (0) target = $region5
  $region4: #{tpu_custom_call.1} parent=0 // pred_region
    _
  $region5: #{tpu_custom_call.1} parent=0 // pred_fallthru
    _
  // Predicated region
  $region6: #{tpu_custom_call.1} parent=0 // pred_check
    _
  $region7: #{tpu_custom_call.1} parent=0 // pred_check_branch
    %16 = sbr.rel (0) target = $region9
  $region8: #{tpu_custom_call.1} parent=0 // pred_region
    _
  $region9: #{tpu_custom_call.1} parent=0 // pred_fallthru
    _
  // Predicated region
  $region10: #{tpu_custom_call.1} parent=0 // pred_check
    _
  $region11: #{tpu_custom_call.1} parent=0 // pred_check_branch
    %18 = sbr.rel (0) target = $region13
  $region12: #{tpu_custom_call.1} parent=0 // pred_region
    _
  $region13: #{tpu_custom_call.1} parent=0 // pred_fallthru
    _
  // Predicated region
  $region14: #{tpu_custom_call.1} parent=0 // pred_check
    _
  $region15: #{tpu_custom_call.1} parent=0 // pred_check_branch
    %20 = sbr.rel (0) target = $region17
  $region16: #{tpu_custom_call.1} parent=0 // pred_region
    _
  $region17: #{tpu_custom_call.1} parent=0 // pred_fallthru
    _
  // Predicated region
  $region18: #{tpu_custom_call.1} parent=0 // pred_check
    _
  $region19: #{tpu_custom_call.1} parent=0 // pred_check_branch
    %22 = sbr.rel (0) target = $region21
  $region20: #{tpu_custom_call.1} parent=0 // pred_region
    _
  $region21: #{tpu_custom_call.1} parent=0 // pred_fallthru
    _
  // Predicated region
  $region22: #{tpu_custom_call.1} parent=0 // pred_check
    _
  $region23: #{tpu_custom_call.1} parent=0 // pred_check_branch
    %24 = sbr.rel (0) target = $region25
  $region24: #{tpu_custom_call.1} parent=0 // pred_region
    _
  $region25: #{tpu_custom_call.1} parent=0 // pred_fallthru
    _
  %v25 = vld [vmem:[%s0] sm:$0xff]
  %v26 = vld [vmem:[%s0 + $0x8] sm:$0xff]
  %v27 = vld [vmem:[%s0 + $0x10] sm:$0xff]
  %v28 = vld [vmem:[%s0 + $0x18] sm:$0xff]
  %v29 = vld [vmem:[%s0 + $0x20] sm:$0xff]
  %v30 = vld [vmem:[%s0 + $0x28] sm:$0xff]
  %v31 = vld [vmem:[%s0 + $0x30] sm:$0xff]
  %v32 = vld [vmem:[%s0 + $0x38] sm:$0xff]
  %v33 = vld [vmem:[%s0 + $0x40] sm:$0xff]
  %v34 = vld [vmem:[%s0 + $0x48] sm:$0xff]
  %v35 = vld [vmem:[%s0 + $0x50] sm:$0xff]
  %v36 = vld [vmem:[%s0 + $0x58] sm:$0xff]
  %v37 = vld [vmem:[%s0 + $0x60] sm:$0xff]
  %v38 = vld [vmem:[%s0 + $0x68] sm:$0xff]
  %v39 = vld [vmem:[%s0 + $0x70] sm:$0xff]
  %v40 = vld [vmem:[%s0 + $0x78] sm:$0xff]
  %v41 = vld [vmem:[%s0 + $0x80] sm:$0xff]
  %v42 = vld [vmem:[%s0 + $0x88] sm:$0xff]
  %v43 = vld [vmem:[%s0 + $0x90] sm:$0xff]
  %v44 = vld [vmem:[%s0 + $0x98] sm:$0xff]
  %v45 = vld [vmem:[%s0 + $0xa0] sm:$0xff]
  %v46 = vld [vmem:[%s0 + $0xa8] sm:$0xff]
  %v47 = vld [vmem:[%s0 + $0xb0] sm:$0xff]
  %v48 = vld [vmem:[%s0 + $0xb8] sm:$0xff]
  %v49 = vld [vmem:[%s0 + $0xc0] sm:$0xff]
  %v50 = vld [vmem:[%s0 + $0xc8] sm:$0xff]
  %v51 = vld [vmem:[%s0 + $0xd0] sm:$0xff]
  %v52 = vld [vmem:[%s0 + $0xd8] sm:$0xff]
  %v53 = vld [vmem:[%s0 + $0xe0] sm:$0xff]
  %v54 = vld [vmem:[%s0 + $0xe8] sm:$0xff]
  %v55 = vld [vmem:[%s0 + $0xf0] sm:$0xff]
  %v56 = vld [vmem:[%s0 + $0xf8] sm:$0xff]
  %v57 = vld [vmem:[%s1] sm:$0xf]
  %v58 = vld [vmem:[%s5] sm:$0x1]
  %v60 = vperm.slane %v58, 0
  %vm62 = vcmask 31744
  %v64 = vsel %vm62, %v25, 0
  %v67 = vsel %vm62, %v26, 0
  %v70 = vsel %vm62, %v27, 0
  %v73 = vsel %vm62, %v28, 0
  %v76 = vsel %vm62, %v29, 0
  %v79 = vsel %vm62, %v30, 0
  %v82 = vsel %vm62, %v31, 0
  %v85 = vsel %vm62, %v32, 0
  %v88 = vsel %vm62, %v33, 0
  %v91 = vsel %vm62, %v34, 0
  %v94 = vsel %vm62, %v35, 0
  %v97 = vsel %vm62, %v36, 0
  %v100 = vsel %vm62, %v37, 0
  %v103 = vsel %vm62, %v38, 0
  %v106 = vsel %vm62, %v39, 0
  %v109 = vsel %vm62, %v40, 0
  %v112 = vsel %vm62, %v41, 0
  %v115 = vsel %vm62, %v42, 0
  %v118 = vsel %vm62, %v43, 0
  %v121 = vsel %vm62, %v44, 0
  %v124 = vsel %vm62, %v45, 0
  %v127 = vsel %vm62, %v46, 0
  %v130 = vsel %vm62, %v47, 0
  %v133 = vsel %vm62, %v48, 0
  %v136 = vsel %vm62, %v49, 0
  %v139 = vsel %vm62, %v50, 0
  %v142 = vsel %vm62, %v51, 0
  %v145 = vsel %vm62, %v52, 0
  %v148 = vsel %vm62, %v53, 0
  %v151 = vsel %vm62, %v54, 0
  %v154 = vsel %vm62, %v55, 0
  %v157 = vsel %vm62, %v56, 0
  %vm159 = vcmask 1043456
  %v161 = vsel %vm159, %v57, 0
  %163 = vmatpush.msra.mxu0 0.0
  %164 = vmatpush.msra.mxu0 0.0
  %165 = vmatpush.msra.mxu0 0.0
  %166 = vmatpush.msra.mxu0 0.0
  %167 = vmatpush.msra.mxu0 0.0
  %168 = vmatpush.msra.mxu0 0.0
  %169 = vmatpush.msra.mxu0 0.0
  %170 = vmatpush.msra.mxu0 0.0
  %171 = vmatpush.msra.mxu0 0.0
  %172 = vmatpush.msra.mxu0 0.0
  %173 = vmatpush.msra.mxu0 0.0
  %174 = vmatpush.msra.mxu0 0.0
  %175 = vmatpush.msra.mxu0 0.0
  %176 = vmatpush.msra.mxu0 0.0
  %177 = vmatpush.msra.mxu0 0.0
  %178 = vmatpush.msra.mxu0 %v161
  %179 = vmatmul.f32.gmra.mxu0 %v64
  %v180 = vpop.f32.mrf.mxu0
  %v181 = vadd.f32 %v60, %v180
  %182 = vmatmul.f32.gmra.mxu0 %v67
  %v183 = vpop.f32.mrf.mxu0
  %v184 = vadd.f32 %v60, %v183
  %185 = vmatmul.f32.gmra.mxu0 %v70
  %v186 = vpop.f32.mrf.mxu0
  %v187 = vadd.f32 %v60, %v186
  %188 = vmatmul.f32.gmra.mxu0 %v73
  %v189 = vpop.f32.mrf.mxu0
  %v190 = vadd.f32 %v60, %v189
  %191 = vmatmul.f32.gmra.mxu0 %v76
  %v192 = vpop.f32.mrf.mxu0
  %v193 = vadd.f32 %v60, %v192
  %194 = vmatmul.f32.gmra.mxu0 %v79
  %v195 = vpop.f32.mrf.mxu0
  %v196 = vadd.f32 %v60, %v195
  %197 = vmatmul.f32.gmra.mxu0 %v82
  %v198 = vpop.f32.mrf.mxu0
  %v199 = vadd.f32 %v60, %v198
  %200 = vmatmul.f32.gmra.mxu0 %v85
  %v201 = vpop.f32.mrf.mxu0
  %v202 = vadd.f32 %v60, %v201
  %203 = vmatmul.f32.gmra.mxu0 %v88
  %v204 = vpop.f32.mrf.mxu0
  %v205 = vadd.f32 %v60, %v204
  %206 = vmatmul.f32.gmra.mxu0 %v91
  %v207 = vpop.f32.mrf.mxu0
  %v208 = vadd.f32 %v60, %v207
  %209 = vmatmul.f32.gmra.mxu0 %v94
  %v210 = vpop.f32.mrf.mxu0
  %v211 = vadd.f32 %v60, %v210
  %212 = vmatmul.f32.gmra.mxu0 %v97
  %v213 = vpop.f32.mrf.mxu0
  %v214 = vadd.f32 %v60, %v213
  %215 = vmatmul.f32.gmra.mxu0 %v100
  %v216 = vpop.f32.mrf.mxu0
  %v217 = vadd.f32 %v60, %v216
  %218 = vmatmul.f32.gmra.mxu0 %v103
  %v219 = vpop.f32.mrf.mxu0
  %v220 = vadd.f32 %v60, %v219
  %221 = vmatmul.f32.gmra.mxu0 %v106
  %v222 = vpop.f32.mrf.mxu0
  %v223 = vadd.f32 %v60, %v222
  %224 = vmatmul.f32.gmra.mxu0 %v109
  %v225 = vpop.f32.mrf.mxu0
  %v226 = vadd.f32 %v60, %v225
  %227 = vmatmul.f32.gmra.mxu0 %v112
  %v228 = vpop.f32.mrf.mxu0
  %v229 = vadd.f32 %v60, %v228
  %230 = vmatmul.f32.gmra.mxu0 %v115
  %v231 = vpop.f32.mrf.mxu0
  %v232 = vadd.f32 %v60, %v231
  %233 = vmatmul.f32.gmra.mxu0 %v118
  %v234 = vpop.f32.mrf.mxu0
  %v235 = vadd.f32 %v60, %v234
  %236 = vmatmul.f32.gmra.mxu0 %v121
  %v237 = vpop.f32.mrf.mxu0
  %v238 = vadd.f32 %v60, %v237
  %239 = vmatmul.f32.gmra.mxu0 %v124
  %v240 = vpop.f32.mrf.mxu0
  %v241 = vadd.f32 %v60, %v240
  %242 = vmatmul.f32.gmra.mxu0 %v127
  %v243 = vpop.f32.mrf.mxu0
  %v244 = vadd.f32 %v60, %v243
  %245 = vmatmul.f32.gmra.mxu0 %v130
  %v246 = vpop.f32.mrf.mxu0
  %v247 = vadd.f32 %v60, %v246
  %248 = vmatmul.f32.gmra.mxu0 %v133
  %v249 = vpop.f32.mrf.mxu0
  %v250 = vadd.f32 %v60, %v249
  %251 = vmatmul.f32.gmra.mxu0 %v136
  %v252 = vpop.f32.mrf.mxu0
  %v253 = vadd.f32 %v60, %v252
  %254 = vmatmul.f32.gmra.mxu0 %v139
  %v255 = vpop.f32.mrf.mxu0
  %v256 = vadd.f32 %v60, %v255
  %257 = vmatmul.f32.gmra.mxu0 %v142
  %v258 = vpop.f32.mrf.mxu0
  %v259 = vadd.f32 %v60, %v258
  %260 = vmatmul.f32.gmra.mxu0 %v145
  %v261 = vpop.f32.mrf.mxu0
  %v262 = vadd.f32 %v60, %v261
  %263 = vmatmul.f32.gmra.mxu0 %v148
  %v264 = vpop.f32.mrf.mxu0
  %v265 = vadd.f32 %v60, %v264
  %266 = vmatmul.f32.gmra.mxu0 %v151
  %v267 = vpop.f32.mrf.mxu0
  %v268 = vadd.f32 %v60, %v267
  %269 = vmatmul.f32.gmra.mxu0 %v154
  %v270 = vpop.f32.mrf.mxu0
  %v271 = vadd.f32 %v60, %v270
  %272 = vmatmul.f32.gmra.mxu0 %v157
  %v273 = vpop.f32.mrf.mxu0
  %v274 = vadd.f32 %v60, %v273
  %275 = vdwg.mxu0
  %v276 = vmax.f32 %v181, 0.0
  %v277 = vmax.f32 %v184, 0.0
  %v278 = vmax.f32 %v187, 0.0
  %v279 = vmax.f32 %v190, 0.0
  %v280 = vmax.f32 %v193, 0.0
  %v281 = vmax.f32 %v196, 0.0
  %v282 = vmax.f32 %v199, 0.0
  %v283 = vmax.f32 %v202, 0.0
  %v284 = vmax.f32 %v205, 0.0
  %v285 = vmax.f32 %v208, 0.0
  %v286 = vmax.f32 %v211, 0.0
  %v287 = vmax.f32 %v214, 0.0
  %v288 = vmax.f32 %v217, 0.0
  %v289 = vmax.f32 %v220, 0.0
  %v290 = vmax.f32 %v223, 0.0
  %v291 = vmax.f32 %v226, 0.0
  %v292 = vmax.f32 %v229, 0.0
  %v293 = vmax.f32 %v232, 0.0
  %v294 = vmax.f32 %v235, 0.0
  %v295 = vmax.f32 %v238, 0.0
  %v296 = vmax.f32 %v241, 0.0
  %v297 = vmax.f32 %v244, 0.0
  %v298 = vmax.f32 %v247, 0.0
  %v299 = vmax.f32 %v250, 0.0
  %v300 = vmax.f32 %v253, 0.0
  %v301 = vmax.f32 %v256, 0.0
  %v302 = vmax.f32 %v259, 0.0
  %v303 = vmax.f32 %v262, 0.0
  %v304 = vmax.f32 %v265, 0.0
  %v305 = vmax.f32 %v268, 0.0
  %v306 = vmax.f32 %v271, 0.0
  %v307 = vmax.f32 %v274, 0.0
  %v308 = vld [vmem:[%s2] sm:$0xff]
  %v309 = vld [vmem:[%s2 + $0x8] sm:$0xff]
  %v310 = vld [vmem:[%s2 + $0x10] sm:$0xff]
  %v311 = vld [vmem:[%s2 + $0x18] sm:$0xff]
  %v312 = vld [vmem:[%s2 + $0x20] sm:$0xff]
  %v313 = vld [vmem:[%s2 + $0x28] sm:$0xff]
  %v314 = vld [vmem:[%s2 + $0x30] sm:$0xff]
  %v315 = vld [vmem:[%s2 + $0x38] sm:$0xff]
  %v316 = vld [vmem:[%s5 + $0x1] sm:$0x1]
  %v318 = vperm.slane %v316, 0
  %vm320 = vcmask 523264
  %v322 = vsel %vm320, %v276, 0
  %v325 = vsel %vm320, %v277, 0
  %v328 = vsel %vm320, %v278, 0
  %v331 = vsel %vm320, %v279, 0
  %v334 = vsel %vm320, %v280, 0
  %v337 = vsel %vm320, %v281, 0
  %v340 = vsel %vm320, %v282, 0
  %v343 = vsel %vm320, %v283, 0
  %v346 = vsel %vm320, %v284, 0
  %v349 = vsel %vm320, %v285, 0
  %v352 = vsel %vm320, %v286, 0
  %v355 = vsel %vm320, %v287, 0
  %v358 = vsel %vm320, %v288, 0
  %v361 = vsel %vm320, %v289, 0
  %v364 = vsel %vm320, %v290, 0
  %v367 = vsel %vm320, %v291, 0
  %v370 = vsel %vm320, %v292, 0
  %v373 = vsel %vm320, %v293, 0
  %v376 = vsel %vm320, %v294, 0
  %v379 = vsel %vm320, %v295, 0
  %v382 = vsel %vm320, %v296, 0
  %v385 = vsel %vm320, %v297, 0
  %v388 = vsel %vm320, %v298, 0
  %v391 = vsel %vm320, %v299, 0
  %v394 = vsel %vm320, %v300, 0
  %v397 = vsel %vm320, %v301, 0
  %v400 = vsel %vm320, %v302, 0
  %v403 = vsel %vm320, %v303, 0
  %v406 = vsel %vm320, %v304, 0
  %v409 = vsel %vm320, %v305, 0
  %v412 = vsel %vm320, %v306, 0
  %v415 = vsel %vm320, %v307, 0
  %417 = vmatpush.msra.mxu0 0.0
  %418 = vmatpush.msra.mxu0 0.0
  %419 = vmatpush.msra.mxu0 0.0
  %420 = vmatpush.msra.mxu0 0.0
  %421 = vmatpush.msra.mxu0 0.0
  %422 = vmatpush.msra.mxu0 0.0
  %423 = vmatpush.msra.mxu0 0.0
  %424 = vmatpush.msra.mxu0 0.0
  %425 = vmatpush.msra.mxu0 %v315
  %426 = vmatpush.msra.mxu0 %v314
  %427 = vmatpush.msra.mxu0 %v313
  %428 = vmatpush.msra.mxu0 %v312
  %429 = vmatpush.msra.mxu0 %v311
  %430 = vmatpush.msra.mxu0 %v310
  %431 = vmatpush.msra.mxu0 %v309
  %432 = vmatpush.msra.mxu0 %v308
  %433 = vmatmul.f32.gmra.mxu0 %v322
  %v434 = vpop.f32.mrf.mxu0
  %v435 = vadd.f32 %v318, %v434
  %436 = vmatmul.f32.gmra.mxu0 %v325
  %v437 = vpop.f32.mrf.mxu0
  %v438 = vadd.f32 %v318, %v437
  %439 = vmatmul.f32.gmra.mxu0 %v328
  %v440 = vpop.f32.mrf.mxu0
  %v441 = vadd.f32 %v318, %v440
  %442 = vmatmul.f32.gmra.mxu0 %v331
  %v443 = vpop.f32.mrf.mxu0
  %v444 = vadd.f32 %v318, %v443
  %445 = vmatmul.f32.gmra.mxu0 %v334
  %v446 = vpop.f32.mrf.mxu0
  %v447 = vadd.f32 %v318, %v446
  %448 = vmatmul.f32.gmra.mxu0 %v337
  %v449 = vpop.f32.mrf.mxu0
  %v450 = vadd.f32 %v318, %v449
  %451 = vmatmul.f32.gmra.mxu0 %v340
  %v452 = vpop.f32.mrf.mxu0
  %v453 = vadd.f32 %v318, %v452
  %454 = vmatmul.f32.gmra.mxu0 %v343
  %v455 = vpop.f32.mrf.mxu0
  %v456 = vadd.f32 %v318, %v455
  %457 = vmatmul.f32.gmra.mxu0 %v346
  %v458 = vpop.f32.mrf.mxu0
  %v459 = vadd.f32 %v318, %v458
  %460 = vmatmul.f32.gmra.mxu0 %v349
  %v461 = vpop.f32.mrf.mxu0
  %v462 = vadd.f32 %v318, %v461
  %463 = vmatmul.f32.gmra.mxu0 %v352
  %v464 = vpop.f32.mrf.mxu0
  %v465 = vadd.f32 %v318, %v464
  %466 = vmatmul.f32.gmra.mxu0 %v355
  %v467 = vpop.f32.mrf.mxu0
  %v468 = vadd.f32 %v318, %v467
  %469 = vmatmul.f32.gmra.mxu0 %v358
  %v470 = vpop.f32.mrf.mxu0
  %v471 = vadd.f32 %v318, %v470
  %472 = vmatmul.f32.gmra.mxu0 %v361
  %v473 = vpop.f32.mrf.mxu0
  %v474 = vadd.f32 %v318, %v473
  %475 = vmatmul.f32.gmra.mxu0 %v364
  %v476 = vpop.f32.mrf.mxu0
  %v477 = vadd.f32 %v318, %v476
  %478 = vmatmul.f32.gmra.mxu0 %v367
  %v479 = vpop.f32.mrf.mxu0
  %v480 = vadd.f32 %v318, %v479
  %481 = vmatmul.f32.gmra.mxu0 %v370
  %v482 = vpop.f32.mrf.mxu0
  %v483 = vadd.f32 %v318, %v482
  %484 = vmatmul.f32.gmra.mxu0 %v373
  %v485 = vpop.f32.mrf.mxu0
  %v486 = vadd.f32 %v318, %v485
  %487 = vmatmul.f32.gmra.mxu0 %v376
  %v488 = vpop.f32.mrf.mxu0
  %v489 = vadd.f32 %v318, %v488
  %490 = vmatmul.f32.gmra.mxu0 %v379
  %v491 = vpop.f32.mrf.mxu0
  %v492 = vadd.f32 %v318, %v491
  %493 = vmatmul.f32.gmra.mxu0 %v382
  %v494 = vpop.f32.mrf.mxu0
  %v495 = vadd.f32 %v318, %v494
  %496 = vmatmul.f32.gmra.mxu0 %v385
  %v497 = vpop.f32.mrf.mxu0
  %v498 = vadd.f32 %v318, %v497
  %499 = vmatmul.f32.gmra.mxu0 %v388
  %v500 = vpop.f32.mrf.mxu0
  %v501 = vadd.f32 %v318, %v500
  %502 = vmatmul.f32.gmra.mxu0 %v391
  %v503 = vpop.f32.mrf.mxu0
  %v504 = vadd.f32 %v318, %v503
  %505 = vmatmul.f32.gmra.mxu0 %v394
  %v506 = vpop.f32.mrf.mxu0
  %v507 = vadd.f32 %v318, %v506
  %508 = vmatmul.f32.gmra.mxu0 %v397
  %v509 = vpop.f32.mrf.mxu0
  %v510 = vadd.f32 %v318, %v509
  %511 = vmatmul.f32.gmra.mxu0 %v400
  %v512 = vpop.f32.mrf.mxu0
  %v513 = vadd.f32 %v318, %v512
  %514 = vmatmul.f32.gmra.mxu0 %v403
  %v515 = vpop.f32.mrf.mxu0
  %v516 = vadd.f32 %v318, %v515
  %517 = vmatmul.f32.gmra.mxu0 %v406
  %v518 = vpop.f32.mrf.mxu0
  %v519 = vadd.f32 %v318, %v518
  %520 = vmatmul.f32.gmra.mxu0 %v409
  %v521 = vpop.f32.mrf.mxu0
  %v522 = vadd.f32 %v318, %v521
  %523 = vmatmul.f32.gmra.mxu0 %v412
  %v524 = vpop.f32.mrf.mxu0
  %v525 = vadd.f32 %v318, %v524
  %526 = vmatmul.f32.gmra.mxu0 %v415
  %v527 = vpop.f32.mrf.mxu0
  %v528 = vadd.f32 %v318, %v527
  %529 = vdwg.mxu0
  %v530 = vmax.f32 %v435, 0.0
  %v531 = vmax.f32 %v438, 0.0
  %v532 = vmax.f32 %v441, 0.0
  %v533 = vmax.f32 %v444, 0.0
  %v534 = vmax.f32 %v447, 0.0
  %v535 = vmax.f32 %v450, 0.0
  %v536 = vmax.f32 %v453, 0.0
  %v537 = vmax.f32 %v456, 0.0
  %v538 = vmax.f32 %v459, 0.0
  %v539 = vmax.f32 %v462, 0.0
  %v540 = vmax.f32 %v465, 0.0
  %v541 = vmax.f32 %v468, 0.0
  %v542 = vmax.f32 %v471, 0.0
  %v543 = vmax.f32 %v474, 0.0
  %v544 = vmax.f32 %v477, 0.0
  %v545 = vmax.f32 %v480, 0.0
  %v546 = vmax.f32 %v483, 0.0
  %v547 = vmax.f32 %v486, 0.0
  %v548 = vmax.f32 %v489, 0.0
  %v549 = vmax.f32 %v492, 0.0
  %v550 = vmax.f32 %v495, 0.0
  %v551 = vmax.f32 %v498, 0.0
  %v552 = vmax.f32 %v501, 0.0
  %v553 = vmax.f32 %v504, 0.0
  %v554 = vmax.f32 %v507, 0.0
  %v555 = vmax.f32 %v510, 0.0
  %v556 = vmax.f32 %v513, 0.0
  %v557 = vmax.f32 %v516, 0.0
  %v558 = vmax.f32 %v519, 0.0
  %v559 = vmax.f32 %v522, 0.0
  %v560 = vmax.f32 %v525, 0.0
  %v561 = vmax.f32 %v528, 0.0
  %v562 = vld [vmem:[%s3] sm:$0xff]
  %v563 = vld [vmem:[%s3 + $0x8] sm:$0xff]
  %v564 = vld [vmem:[%s3 + $0x10] sm:$0xff]
  %v565 = vld [vmem:[%s3 + $0x18] sm:$0xff]
  %v566 = vld [vmem:[%s3 + $0x20] sm:$0xff]
  %v567 = vld [vmem:[%s3 + $0x28] sm:$0xff]
  %v568 = vld [vmem:[%s3 + $0x30] sm:$0xff]
  %v569 = vld [vmem:[%s3 + $0x38] sm:$0xff]
  %v570 = vld [vmem:[%s3 + $0x40] sm:$0xff]
  %v571 = vld [vmem:[%s3 + $0x48] sm:$0xff]
  %v572 = vld [vmem:[%s3 + $0x50] sm:$0xff]
  %v573 = vld [vmem:[%s3 + $0x58] sm:$0xff]
  %v574 = vld [vmem:[%s3 + $0x60] sm:$0xff]
  %v575 = vld [vmem:[%s3 + $0x68] sm:$0xff]
  %v576 = vld [vmem:[%s3 + $0x70] sm:$0xff]
  %v577 = vld [vmem:[%s3 + $0x78] sm:$0xff]
  %v578 = vld [vmem:[%s5 + $0x2] sm:$0x1]
  %v580 = vperm.slane %v578, 0
  %582 = vmatpush.msra.mxu0 %v577
  %583 = vmatpush.msra.mxu0 %v576
  %584 = vmatpush.msra.mxu0 %v575
  %585 = vmatpush.msra.mxu0 %v574
  %586 = vmatpush.msra.mxu0 %v573
  %587 = vmatpush.msra.mxu0 %v572
  %588 = vmatpush.msra.mxu0 %v571
  %589 = vmatpush.msra.mxu0 %v570
  %590 = vmatpush.msra.mxu0 %v569
  %591 = vmatpush.msra.mxu0 %v568
  %592 = vmatpush.msra.mxu0 %v567
  %593 = vmatpush.msra.mxu0 %v566
  %594 = vmatpush.msra.mxu0 %v565
  %595 = vmatpush.msra.mxu0 %v564
  %596 = vmatpush.msra.mxu0 %v563
  %597 = vmatpush.msra.mxu0 %v562
  %598 = vmatmul.f32.gmra.mxu0 %v530
  %v599 = vpop.f32.mrf.mxu0
  %v600 = vadd.f32 %v580, %v599
  %601 = vmatmul.f32.gmra.mxu0 %v531
  %v602 = vpop.f32.mrf.mxu0
  %v603 = vadd.f32 %v580, %v602
  %604 = vmatmul.f32.gmra.mxu0 %v532
  %v605 = vpop.f32.mrf.mxu0
  %v606 = vadd.f32 %v580, %v605
  %607 = vmatmul.f32.gmra.mxu0 %v533
  %v608 = vpop.f32.mrf.mxu0
  %v609 = vadd.f32 %v580, %v608
  %610 = vmatmul.f32.gmra.mxu0 %v534
  %v611 = vpop.f32.mrf.mxu0
  %v612 = vadd.f32 %v580, %v611
  %613 = vmatmul.f32.gmra.mxu0 %v535
  %v614 = vpop.f32.mrf.mxu0
  %v615 = vadd.f32 %v580, %v614
  %616 = vmatmul.f32.gmra.mxu0 %v536
  %v617 = vpop.f32.mrf.mxu0
  %v618 = vadd.f32 %v580, %v617
  %619 = vmatmul.f32.gmra.mxu0 %v537
  %v620 = vpop.f32.mrf.mxu0
  %v621 = vadd.f32 %v580, %v620
  %622 = vmatmul.f32.gmra.mxu0 %v538
  %v623 = vpop.f32.mrf.mxu0
  %v624 = vadd.f32 %v580, %v623
  %625 = vmatmul.f32.gmra.mxu0 %v539
  %v626 = vpop.f32.mrf.mxu0
  %v627 = vadd.f32 %v580, %v626
  %628 = vmatmul.f32.gmra.mxu0 %v540
  %v629 = vpop.f32.mrf.mxu0
  %v630 = vadd.f32 %v580, %v629
  %631 = vmatmul.f32.gmra.mxu0 %v541
  %v632 = vpop.f32.mrf.mxu0
  %v633 = vadd.f32 %v580, %v632
  %634 = vmatmul.f32.gmra.mxu0 %v542
  %v635 = vpop.f32.mrf.mxu0
  %v636 = vadd.f32 %v580, %v635
  %637 = vmatmul.f32.gmra.mxu0 %v543
  %v638 = vpop.f32.mrf.mxu0
  %v639 = vadd.f32 %v580, %v638
  %640 = vmatmul.f32.gmra.mxu0 %v544
  %v641 = vpop.f32.mrf.mxu0
  %v642 = vadd.f32 %v580, %v641
  %643 = vmatmul.f32.gmra.mxu0 %v545
  %v644 = vpop.f32.mrf.mxu0
  %v645 = vadd.f32 %v580, %v644
  %646 = vmatmul.f32.gmra.mxu0 %v546
  %v647 = vpop.f32.mrf.mxu0
  %v648 = vadd.f32 %v580, %v647
  %649 = vmatmul.f32.gmra.mxu0 %v547
  %v650 = vpop.f32.mrf.mxu0
  %v651 = vadd.f32 %v580, %v650
  %652 = vmatmul.f32.gmra.mxu0 %v548
  %v653 = vpop.f32.mrf.mxu0
  %v654 = vadd.f32 %v580, %v653
  %655 = vmatmul.f32.gmra.mxu0 %v549
  %v656 = vpop.f32.mrf.mxu0
  %v657 = vadd.f32 %v580, %v656
  %658 = vmatmul.f32.gmra.mxu0 %v550
  %v659 = vpop.f32.mrf.mxu0
  %v660 = vadd.f32 %v580, %v659
  %661 = vmatmul.f32.gmra.mxu0 %v551
  %v662 = vpop.f32.mrf.mxu0
  %v663 = vadd.f32 %v580, %v662
  %664 = vmatmul.f32.gmra.mxu0 %v552
  %v665 = vpop.f32.mrf.mxu0
  %v666 = vadd.f32 %v580, %v665
  %667 = vmatmul.f32.gmra.mxu0 %v553
  %v668 = vpop.f32.mrf.mxu0
  %v669 = vadd.f32 %v580, %v668
  %670 = vmatmul.f32.gmra.mxu0 %v554
  %v671 = vpop.f32.mrf.mxu0
  %v672 = vadd.f32 %v580, %v671
  %673 = vmatmul.f32.gmra.mxu0 %v555
  %v674 = vpop.f32.mrf.mxu0
  %v675 = vadd.f32 %v580, %v674
  %676 = vmatmul.f32.gmra.mxu0 %v556
  %v677 = vpop.f32.mrf.mxu0
  %v678 = vadd.f32 %v580, %v677
  %679 = vmatmul.f32.gmra.mxu0 %v557
  %v680 = vpop.f32.mrf.mxu0
  %v681 = vadd.f32 %v580, %v680
  %682 = vmatmul.f32.gmra.mxu0 %v558
  %v683 = vpop.f32.mrf.mxu0
  %v684 = vadd.f32 %v580, %v683
  %685 = vmatmul.f32.gmra.mxu0 %v559
  %v686 = vpop.f32.mrf.mxu0
  %v687 = vadd.f32 %v580, %v686
  %688 = vmatmul.f32.gmra.mxu0 %v560
  %v689 = vpop.f32.mrf.mxu0
  %v690 = vadd.f32 %v580, %v689
  %691 = vmatmul.f32.gmra.mxu0 %v561
  %v692 = vpop.f32.mrf.mxu0
  %v693 = vadd.f32 %v580, %v692
  %694 = vdwg.mxu0
  %v695 = vld [vmem:[%s4] sm:$0xff]
  %v696 = vld [vmem:[%s4 + $0x8] sm:$0xff]
  %v697 = vld [vmem:[%s4 + $0x10] sm:$0xff]
  %v698 = vld [vmem:[%s4 + $0x18] sm:$0xff]
  %v699 = vld [vmem:[%s4 + $0x20] sm:$0xff]
  %v700 = vld [vmem:[%s4 + $0x28] sm:$0xff]
  %v701 = vld [vmem:[%s4 + $0x30] sm:$0xff]
  %v702 = vld [vmem:[%s4 + $0x38] sm:$0xff]
  %v703 = vld [vmem:[%s4 + $0x40] sm:$0xff]
  %v704 = vld [vmem:[%s4 + $0x48] sm:$0xff]
  %v705 = vld [vmem:[%s4 + $0x50] sm:$0xff]
  %v706 = vld [vmem:[%s4 + $0x58] sm:$0xff]
  %v707 = vld [vmem:[%s4 + $0x60] sm:$0xff]
  %v708 = vld [vmem:[%s4 + $0x68] sm:$0xff]
  %v709 = vld [vmem:[%s4 + $0x70] sm:$0xff]
  %v710 = vld [vmem:[%s4 + $0x78] sm:$0xff]
  %v711 = vld [vmem:[%s5 + $0x3] sm:$0x1]
  %v713 = vperm.slane %v711, 0
  %715 = vmatpush.msra.mxu0 %v710
  %716 = vmatpush.msra.mxu0 %v709
  %717 = vmatpush.msra.mxu0 %v708
  %718 = vmatpush.msra.mxu0 %v707
  %719 = vmatpush.msra.mxu0 %v706
  %720 = vmatpush.msra.mxu0 %v705
  %721 = vmatpush.msra.mxu0 %v704
  %722 = vmatpush.msra.mxu0 %v703
  %723 = vmatpush.msra.mxu0 %v702
  %724 = vmatpush.msra.mxu0 %v701
  %725 = vmatpush.msra.mxu0 %v700
  %726 = vmatpush.msra.mxu0 %v699
  %727 = vmatpush.msra.mxu0 %v698
  %728 = vmatpush.msra.mxu0 %v697
  %729 = vmatpush.msra.mxu0 %v696
  %730 = vmatpush.msra.mxu0 %v695
  %731 = vmatmul.f32.gmra.mxu0 %v530
  %v732 = vpop.f32.mrf.mxu0
  %v733 = vadd.f32 %v713, %v732
  %734 = vmatmul.f32.gmra.mxu0 %v531
  %v735 = vpop.f32.mrf.mxu0
  %v736 = vadd.f32 %v713, %v735
  %737 = vmatmul.f32.gmra.mxu0 %v532
  %v738 = vpop.f32.mrf.mxu0
  %v739 = vadd.f32 %v713, %v738
  %740 = vmatmul.f32.gmra.mxu0 %v533
  %v741 = vpop.f32.mrf.mxu0
  %v742 = vadd.f32 %v713, %v741
  %743 = vmatmul.f32.gmra.mxu0 %v534
  %v744 = vpop.f32.mrf.mxu0
  %v745 = vadd.f32 %v713, %v744
  %746 = vmatmul.f32.gmra.mxu0 %v535
  %v747 = vpop.f32.mrf.mxu0
  %v748 = vadd.f32 %v713, %v747
  %749 = vmatmul.f32.gmra.mxu0 %v536
  %v750 = vpop.f32.mrf.mxu0
  %v751 = vadd.f32 %v713, %v750
  %752 = vmatmul.f32.gmra.mxu0 %v537
  %v753 = vpop.f32.mrf.mxu0
  %v754 = vadd.f32 %v713, %v753
  %755 = vmatmul.f32.gmra.mxu0 %v538
  %v756 = vpop.f32.mrf.mxu0
  %v757 = vadd.f32 %v713, %v756
  %758 = vmatmul.f32.gmra.mxu0 %v539
  %v759 = vpop.f32.mrf.mxu0
  %v760 = vadd.f32 %v713, %v759
  %761 = vmatmul.f32.gmra.mxu0 %v540
  %v762 = vpop.f32.mrf.mxu0
  %v763 = vadd.f32 %v713, %v762
  %764 = vmatmul.f32.gmra.mxu0 %v541
  %v765 = vpop.f32.mrf.mxu0
  %v766 = vadd.f32 %v713, %v765
  %767 = vmatmul.f32.gmra.mxu0 %v542
  %v768 = vpop.f32.mrf.mxu0
  %v769 = vadd.f32 %v713, %v768
  %770 = vmatmul.f32.gmra.mxu0 %v543
  %v771 = vpop.f32.mrf.mxu0
  %v772 = vadd.f32 %v713, %v771
  %773 = vmatmul.f32.gmra.mxu0 %v544
  %v774 = vpop.f32.mrf.mxu0
  %v775 = vadd.f32 %v713, %v774
  %776 = vmatmul.f32.gmra.mxu0 %v545
  %v777 = vpop.f32.mrf.mxu0
  %v778 = vadd.f32 %v713, %v777
  %779 = vmatmul.f32.gmra.mxu0 %v546
  %v780 = vpop.f32.mrf.mxu0
  %v781 = vadd.f32 %v713, %v780
  %782 = vmatmul.f32.gmra.mxu0 %v547
  %v783 = vpop.f32.mrf.mxu0
  %v784 = vadd.f32 %v713, %v783
  %785 = vmatmul.f32.gmra.mxu0 %v548
  %v786 = vpop.f32.mrf.mxu0
  %v787 = vadd.f32 %v713, %v786
  %788 = vmatmul.f32.gmra.mxu0 %v549
  %v789 = vpop.f32.mrf.mxu0
  %v790 = vadd.f32 %v713, %v789
  %791 = vmatmul.f32.gmra.mxu0 %v550
  %v792 = vpop.f32.mrf.mxu0
  %v793 = vadd.f32 %v713, %v792
  %794 = vmatmul.f32.gmra.mxu0 %v551
  %v795 = vpop.f32.mrf.mxu0
  %v796 = vadd.f32 %v713, %v795
  %797 = vmatmul.f32.gmra.mxu0 %v552
  %v798 = vpop.f32.mrf.mxu0
  %v799 = vadd.f32 %v713, %v798
  %800 = vmatmul.f32.gmra.mxu0 %v553
  %v801 = vpop.f32.mrf.mxu0
  %v802 = vadd.f32 %v713, %v801
  %803 = vmatmul.f32.gmra.mxu0 %v554
  %v804 = vpop.f32.mrf.mxu0
  %v805 = vadd.f32 %v713, %v804
  %806 = vmatmul.f32.gmra.mxu0 %v555
  %v807 = vpop.f32.mrf.mxu0
  %v808 = vadd.f32 %v713, %v807
  %809 = vmatmul.f32.gmra.mxu0 %v556
  %v810 = vpop.f32.mrf.mxu0
  %v811 = vadd.f32 %v713, %v810
  %812 = vmatmul.f32.gmra.mxu0 %v557
  %v813 = vpop.f32.mrf.mxu0
  %v814 = vadd.f32 %v713, %v813
  %815 = vmatmul.f32.gmra.mxu0 %v558
  %v816 = vpop.f32.mrf.mxu0
  %v817 = vadd.f32 %v713, %v816
  %818 = vmatmul.f32.gmra.mxu0 %v559
  %v819 = vpop.f32.mrf.mxu0
  %v820 = vadd.f32 %v713, %v819
  %821 = vmatmul.f32.gmra.mxu0 %v560
  %v822 = vpop.f32.mrf.mxu0
  %v823 = vadd.f32 %v713, %v822
  %824 = vmatmul.f32.gmra.mxu0 %v561
  %v825 = vpop.f32.mrf.mxu0
  %v826 = vadd.f32 %v713, %v825
  %827 = vdwg.mxu0
  %vm828 = vcmask 154624
  %829 = vst.msk [vmem:[%s6] sm:$0xff] %vm828, %v600
  %830 = vst.msk [vmem:[%s6 + $0x8] sm:$0xff] %vm828, %v603
  %831 = vst.msk [vmem:[%s6 + $0x10] sm:$0xff] %vm828, %v606
  %832 = vst.msk [vmem:[%s6 + $0x18] sm:$0xff] %vm828, %v609
  %833 = vst.msk [vmem:[%s6 + $0x20] sm:$0xff] %vm828, %v612
  %834 = vst.msk [vmem:[%s6 + $0x28] sm:$0xff] %vm828, %v615
  %835 = vst.msk [vmem:[%s6 + $0x30] sm:$0xff] %vm828, %v618
  %836 = vst.msk [vmem:[%s6 + $0x38] sm:$0xff] %vm828, %v621
  %837 = vst.msk [vmem:[%s6 + $0x40] sm:$0xff] %vm828, %v624
  %838 = vst.msk [vmem:[%s6 + $0x48] sm:$0xff] %vm828, %v627
  %839 = vst.msk [vmem:[%s6 + $0x50] sm:$0xff] %vm828, %v630
  %840 = vst.msk [vmem:[%s6 + $0x58] sm:$0xff] %vm828, %v633
  %841 = vst.msk [vmem:[%s6 + $0x60] sm:$0xff] %vm828, %v636
  %842 = vst.msk [vmem:[%s6 + $0x68] sm:$0xff] %vm828, %v639
  %843 = vst.msk [vmem:[%s6 + $0x70] sm:$0xff] %vm828, %v642
  %844 = vst.msk [vmem:[%s6 + $0x78] sm:$0xff] %vm828, %v645
  %845 = vst.msk [vmem:[%s6 + $0x80] sm:$0xff] %vm828, %v648
  %846 = vst.msk [vmem:[%s6 + $0x88] sm:$0xff] %vm828, %v651
  %847 = vst.msk [vmem:[%s6 + $0x90] sm:$0xff] %vm828, %v654
  %848 = vst.msk [vmem:[%s6 + $0x98] sm:$0xff] %vm828, %v657
  %849 = vst.msk [vmem:[%s6 + $0xa0] sm:$0xff] %vm828, %v660
  %850 = vst.msk [vmem:[%s6 + $0xa8] sm:$0xff] %vm828, %v663
  %851 = vst.msk [vmem:[%s6 + $0xb0] sm:$0xff] %vm828, %v666
  %852 = vst.msk [vmem:[%s6 + $0xb8] sm:$0xff] %vm828, %v669
  %853 = vst.msk [vmem:[%s6 + $0xc0] sm:$0xff] %vm828, %v672
  %854 = vst.msk [vmem:[%s6 + $0xc8] sm:$0xff] %vm828, %v675
  %855 = vst.msk [vmem:[%s6 + $0xd0] sm:$0xff] %vm828, %v678
  %856 = vst.msk [vmem:[%s6 + $0xd8] sm:$0xff] %vm828, %v681
  %857 = vst.msk [vmem:[%s6 + $0xe0] sm:$0xff] %vm828, %v684
  %858 = vst.msk [vmem:[%s6 + $0xe8] sm:$0xff] %vm828, %v687
  %859 = vst.msk [vmem:[%s6 + $0xf0] sm:$0xff] %vm828, %v690
  %860 = vst.msk [vmem:[%s6 + $0xf8] sm:$0xff] %vm828, %v693
  %vm861 = vcmask 261120
  %862 = vst.msk [vmem:[%s7] sm:$0xff] %vm861, %v733
  %863 = vst.msk [vmem:[%s7 + $0x8] sm:$0xff] %vm861, %v736
  %864 = vst.msk [vmem:[%s7 + $0x10] sm:$0xff] %vm861, %v739
  %865 = vst.msk [vmem:[%s7 + $0x18] sm:$0xff] %vm861, %v742
  %866 = vst.msk [vmem:[%s7 + $0x20] sm:$0xff] %vm861, %v745
  %867 = vst.msk [vmem:[%s7 + $0x28] sm:$0xff] %vm861, %v748
  %868 = vst.msk [vmem:[%s7 + $0x30] sm:$0xff] %vm861, %v751
  %869 = vst.msk [vmem:[%s7 + $0x38] sm:$0xff] %vm861, %v754
  %870 = vst.msk [vmem:[%s7 + $0x40] sm:$0xff] %vm861, %v757
  %871 = vst.msk [vmem:[%s7 + $0x48] sm:$0xff] %vm861, %v760
  %872 = vst.msk [vmem:[%s7 + $0x50] sm:$0xff] %vm861, %v763
  %873 = vst.msk [vmem:[%s7 + $0x58] sm:$0xff] %vm861, %v766
  %874 = vst.msk [vmem:[%s7 + $0x60] sm:$0xff] %vm861, %v769
  %875 = vst.msk [vmem:[%s7 + $0x68] sm:$0xff] %vm861, %v772
  %876 = vst.msk [vmem:[%s7 + $0x70] sm:$0xff] %vm861, %v775
  %877 = vst.msk [vmem:[%s7 + $0x78] sm:$0xff] %vm861, %v778
  %878 = vst.msk [vmem:[%s7 + $0x80] sm:$0xff] %vm861, %v781
  %879 = vst.msk [vmem:[%s7 + $0x88] sm:$0xff] %vm861, %v784
  %880 = vst.msk [vmem:[%s7 + $0x90] sm:$0xff] %vm861, %v787
  %881 = vst.msk [vmem:[%s7 + $0x98] sm:$0xff] %vm861, %v790
  %882 = vst.msk [vmem:[%s7 + $0xa0] sm:$0xff] %vm861, %v793
  %883 = vst.msk [vmem:[%s7 + $0xa8] sm:$0xff] %vm861, %v796
  %884 = vst.msk [vmem:[%s7 + $0xb0] sm:$0xff] %vm861, %v799
  %885 = vst.msk [vmem:[%s7 + $0xb8] sm:$0xff] %vm861, %v802
  %886 = vst.msk [vmem:[%s7 + $0xc0] sm:$0xff] %vm861, %v805
  %887 = vst.msk [vmem:[%s7 + $0xc8] sm:$0xff] %vm861, %v808
  %888 = vst.msk [vmem:[%s7 + $0xd0] sm:$0xff] %vm861, %v811
  %889 = vst.msk [vmem:[%s7 + $0xd8] sm:$0xff] %vm861, %v814
  %890 = vst.msk [vmem:[%s7 + $0xe0] sm:$0xff] %vm861, %v817
  %891 = vst.msk [vmem:[%s7 + $0xe8] sm:$0xff] %vm861, %v820
  %892 = vst.msk [vmem:[%s7 + $0xf0] sm:$0xff] %vm861, %v823
  %893 = vst.msk [vmem:[%s7 + $0xf8] sm:$0xff] %vm861, %v826
  // Predicated region
  $region26: #{tpu_custom_call.1} parent=0 // pred_check
    _
  $region27: #{tpu_custom_call.1} parent=0 // pred_check_branch
    %895 = sbr.rel (0) target = $region29
  $region28: #{tpu_custom_call.1} parent=0 // pred_region
    _
  $region29: #{tpu_custom_call.1} parent=0 // pred_fallthru
    _
  // Predicated region
  $region30: #{tpu_custom_call.1} parent=0 // pred_check
    _
  $region31: #{tpu_custom_call.1} parent=0 // pred_check_branch
    %897 = sbr.rel (0) target = $region33
  $region32: #{tpu_custom_call.1} parent=0 // pred_region
    _
  $region33: #{tpu_custom_call.1} parent=0 // pred_fallthru
    _
  // Predicated region
  $region34: #{tpu_custom_call.1} parent=0 // pred_check
    _
  $region35: #{tpu_custom_call.1} parent=0 // pred_check_branch
    %899 = sbr.rel (0) target = $region37
  $region36: #{tpu_custom_call.1} parent=0 // pred_region
    _
  $region37: #{tpu_custom_call.1} parent=0 // pred_fallthru
    _
  // Predicated region
  $region38: #{tpu_custom_call.1} parent=0 // pred_check
    _
  $region39: #{tpu_custom_call.1} parent=0 // pred_check_branch
    %901 = sbr.rel (0) target = $region41
  $region40: #{tpu_custom_call.1} parent=0 // pred_region
    _
  $region41: #{tpu_custom_call.1} parent=0 // pred_fallthru
    _

</llo_original>
